<compile_context>
chip_gen: v5e
topology: v5e:2x2
jax: 0.10.0
libtpu: 0.0.40
codegen_flags: <defaults>
</compile_context>

<pallas_src>
import functools
import math

import jax
import jax.numpy as jnp
from jax.experimental import pallas as pl
from jax.experimental.pallas import tpu as pltpu


def _arcface_kernel(hot_ref, label_ref, scale_ref, cosine_ref, out_ref, *,
                    block_c, n_col_blocks, cos_m, sin_m):
    i = pl.program_id(0)            # row (batch) tile
    j = pl.program_id(1)            # class tile (last grid axis -> label DMA reuse)

    x = cosine_ref[...].astype(jnp.float32)       # (tb, tc)
    scale = scale_ref[0]                          # scalar from SMEM

    # Fast path (vast majority of tiles): no label column falls in this tile.
    out_ref[...] = (x * scale).astype(out_ref.dtype)

    # Margin path only for tiles that contain some row's label column.
    @pl.when(hot_ref[i * n_col_blocks + j] > 0)
    def _():
        # Local one-hot: col == label - j*block_c. Labels of -1 map to negative
        # local indices and never match (local cols are >= 0), so no extra test.
        lbl_local = label_ref[...] - j * block_c                   # (tb, 1) int32
        col = jax.lax.broadcasted_iota(jnp.int32, x.shape, 1)      # (tb, tc)
        hot = col == lbl_local
        # Exact: cos(acos(x) + m) = x*cos(m) - sqrt(1 - x^2)*sin(m), clamped >= 0.
        sin_theta = jnp.sqrt(jnp.maximum(1.0 - x * x, 0.0))
        margined = x * cos_m - sin_theta * sin_m
        out_ref[...] = (jnp.where(hot, margined, x) * scale).astype(out_ref.dtype)


def _round_down(x, a):
    return max(a, (x // a) * a)


def arcface_scale(cosine, label, scale, *, m=0.5,
                  block_rows=1024, block_cols=2048,
                  max_tile_bytes=8 * 1024 * 1024):
    """cosine: [B, C] (f32 or bf16), label: int[B] (-1 == ignore), scale: scalar."""
    B, C = cosine.shape
    itemsize = jnp.dtype(cosine.dtype).itemsize
    row_align = 8 if itemsize >= 4 else 16      # f32 sublane 8; bf16 packs 16

    # Lane-dense class tile: full axis if it fits, else a multiple of 128 (cdiv grid
    # handles the ragged last block).
    tc = C if C <= block_cols else _round_down(block_cols, 128)
    # Row tile capped so one tile stays <= max_tile_bytes (4 double-buffered copies
    # then stay well under the 48 MiB limit / v7x's 64 MiB physical VMEM).
    rows_budget = max(row_align, max_tile_bytes // max(tc * itemsize, 1))
    tb_cap = min(block_rows, rows_budget)
    tb = B if B <= tb_cap else _round_down(tb_cap, row_align)

    # Guarantee >= 2 grid steps when possible so both v7x TensorCores get work.
    if (-(-B // tb)) * (-(-C // tc)) < 2:
        if B > row_align:
            tb = _round_down(-(-B // 2), row_align)
        elif C > 128:
            tc = _round_down(-(-C // 2), 128)

    gi = -(-B // tb)
    gj = -(-C // tc)

    label_i32 = label.astype(jnp.int32)

    # Per-(row block, class block) "contains a label" map -> scalar-prefetched to SMEM.
    valid = (label_i32 >= 0) & (label_i32 < C)
    row_blk = jnp.arange(B, dtype=jnp.int32) // tb
    col_blk = jnp.where(valid, label_i32, 0) // tc
    hot_map = jnp.zeros((gi * gj,), jnp.int32).at[
        row_blk * gj + col_blk].max(valid.astype(jnp.int32))

    label2 = label_i32.reshape(B, 1)
    scale1 = jnp.asarray(scale, jnp.float32).reshape(1)

    kernel = functools.partial(
        _arcface_kernel, block_c=tc, n_col_blocks=gj,
        cos_m=float(math.cos(m)), sin_m=float(math.sin(m)))

    return pl.pallas_call(
        kernel,
        out_shape=jax.ShapeDtypeStruct((B, C), cosine.dtype),
        grid_spec=pltpu.PrefetchScalarGridSpec(
            num_scalar_prefetch=1,                  # hot_map -> SMEM
            # Class axis LAST so the (tb, 1) label block is fetched once per row tile.
            grid=(gi, gj),
            in_specs=[
                pl.BlockSpec((tb, 1), lambda i, j, hm: (i, 0)),        # label
                pl.BlockSpec(memory_space=pltpu.MemorySpace.SMEM),     # scale
                pl.BlockSpec((tb, tc), lambda i, j, hm: (i, j)),       # cosine
            ],
            out_specs=pl.BlockSpec((tb, tc), lambda i, j, hm: (i, j)),
        ),
        # In-place PyTorch semantics: output reuses cosine's HBM buffer when donated.
        # Indices count the scalar-prefetch operand: hot_map=0, label=1, scale=2, cosine=3.
        input_output_aliases={3: 0},
        compiler_params=pltpu.CompilerParams(
            dimension_semantics=("parallel", "parallel"),
            vmem_limit_bytes=48 * 1024 * 1024),
    )(hot_map, label2, scale1, cosine)


def _reference(cosine, label, scale, m=0.5):
    theta = jnp.arccos(jnp.clip(cosine, -1.0, 1.0))
    col = jnp.arange(cosine.shape[1])[None, :]
    hot = (label[:, None] != -1) & (col == label[:, None])
    return jnp.cos(theta + jnp.where(hot, m, 0.0)) * scale


if __name__ == "__main__":
    key = jax.random.PRNGKey(0)
    k1, k2, k3, k4 = jax.random.split(key, 4)

    M_MARGIN = 0.5            # module __init__ default (only parameter)
    scale = jnp.float32(64.0)

    # --- case 1: aligned small shapes (batch=16, num_classes=512) ---
    B, C = 16, 512
    cosine = jnp.tanh(jax.random.normal(k1, (B, C), dtype=jnp.float32))
    label = jax.random.randint(k2, (B,), 0, C, dtype=jnp.int32)
    label = label.at[3].set(-1)          # exercise the label != -1 (ignore) path
    ref = _reference(cosine, label, scale, m=M_MARGIN)

    # default (large, lane-dense) tiling — grid split so >= 2 steps (megacore)
    out = jax.block_until_ready(
        arcface_scale(jnp.array(cosine), label, scale, m=M_MARGIN))
    assert out.shape == (B, C) and out.dtype == cosine.dtype
    assert jnp.allclose(out, ref, atol=1e-4, rtol=1e-4), "mismatch vs reference"

    # small tiles: multi-tile grid exercises the hot-tile skip and column offsets
    out2 = jax.block_until_ready(
        arcface_scale(jnp.array(cosine), label, scale, m=M_MARGIN,
                      block_rows=8, block_cols=128))
    assert jnp.allclose(out2, ref, atol=1e-4, rtol=1e-4), "mismatch (tiled) vs reference"

    # --- case 2: ragged shapes (cdiv grid / masked edge blocks) ---
    B2, C2 = 13, 200
    cosine2 = jnp.tanh(jax.random.normal(k3, (B2, C2), dtype=jnp.float32))
    label2 = jax.random.randint(k4, (B2,), 0, C2, dtype=jnp.int32)
    label2 = label2.at[0].set(-1)
    ref2 = _reference(cosine2, label2, scale, m=M_MARGIN)

    out3 = jax.block_until_ready(
        arcface_scale(jnp.array(cosine2), label2, scale, m=M_MARGIN))
    assert jnp.allclose(out3, ref2, atol=1e-4, rtol=1e-4), "mismatch (ragged) vs reference"

    out4 = jax.block_until_ready(
        arcface_scale(jnp.array(cosine2), label2, scale, m=M_MARGIN,
                      block_rows=8, block_cols=128))
    assert jnp.allclose(out4, ref2, atol=1e-4, rtol=1e-4), "mismatch (ragged, tiled) vs reference"

    print("KERNEL_OK")
</pallas_src>

<mosaic_0001>
module attributes {stable_mosaic.version = 11 : i64} {
  func.func @_arcface_kernel(%arg0: i32, %arg1: i32, %arg2: memref<2xi32, #tpu.memory_space<smem>>, %arg3: memref<8x1xi32, #tpu.memory_space<vmem>>, %arg4: memref<1xf32, #tpu.memory_space<smem>>, %arg5: memref<8x512xf32, #tpu.memory_space<vmem>>, %arg6: memref<8x512xf32, #tpu.memory_space<vmem>>) attributes {dimension_semantics = [#tpu.dimension_semantics<parallel>, #tpu.dimension_semantics<parallel>], iteration_bounds = array<i64: 2, 1>, scalar_prefetch = 1 : i64, scratch_operands = 0 : i64, tpu.core_type = #tpu.core_type<tc>, window_params = [{transform_indices = @transform_0, window_bounds = array<i64: 8, 1>}, {transform_indices = @transform_1, window_bounds = array<i64: 1>}, {transform_indices = @transform_2, window_bounds = array<i64: 8, 512>}, {transform_indices = @transform_3, window_bounds = array<i64: 8, 512>}]} {
    %c0 = arith.constant 0 : index
    %c0_0 = arith.constant 0 : index
    %0 = vector.load %arg5[%c0, %c0_0] : memref<8x512xf32, #tpu.memory_space<vmem>>, vector<8x512xf32>
    %c0_1 = arith.constant 0 : index
    %1 = memref.load %arg4[%c0_1] : memref<1xf32, #tpu.memory_space<smem>>
    %2 = vector.broadcast %1 : f32 to vector<8x512xf32>
    %3 = arith.mulf %0, %2 : vector<8x512xf32>
    %c0_2 = arith.constant 0 : index
    %c0_3 = arith.constant 0 : index
    %4 = vector.load %arg6[%c0_2, %c0_3] : memref<8x512xf32, #tpu.memory_space<vmem>>, vector<8x512xf32>
    tpu.vector_store %arg6[%c0_2, %c0_3], %3 {strides = array<i32>} : memref<8x512xf32, #tpu.memory_space<vmem>>, vector<8x512xf32>,
    %c1_i32 = arith.constant 1 : i32
    %5 = arith.muli %arg0, %c1_i32 : i32
    %6 = arith.addi %5, %arg1 : i32
    %7 = arith.index_cast %6 : i32 to index
    %8 = memref.load %arg2[%7] : memref<2xi32, #tpu.memory_space<smem>>
    %c0_i32 = arith.constant 0 : i32
    %9 = arith.cmpi sgt, %8, %c0_i32 : i32
    %10 = arith.extui %9 : i1 to i32
    %c0_i32_4 = arith.constant 0 : i32
    %11 = arith.cmpi ne, %10, %c0_i32_4 : i32
    scf.if %11 {
      %c0_5 = arith.constant 0 : index
      %c0_6 = arith.constant 0 : index
      %12 = vector.load %arg3[%c0_5, %c0_6] : memref<8x1xi32, #tpu.memory_space<vmem>>, vector<8x1xi32>
      %c512_i32 = arith.constant 512 : i32
      %13 = arith.muli %arg1, %c512_i32 : i32
      %14 = vector.broadcast %13 : i32 to vector<8x1xi32>
      %15 = arith.subi %12, %14 : vector<8x1xi32>
      %16 = tpu.iota {dimensions = array<i32: 1>} : vector<8x512xi32>
      %17 = vector.broadcast %15 : vector<8x1xi32> to vector<8x512xi32>
      %18 = arith.cmpi eq, %16, %17 : vector<8x512xi32>
      %19 = arith.mulf %0, %0 : vector<8x512xf32>
      %cst = arith.constant 1.000000e+00 : f32
      %20 = vector.broadcast %cst : f32 to vector<8x512xf32>
      %21 = arith.subf %20, %19 : vector<8x512xf32>
      %cst_7 = arith.constant 0.000000e+00 : f32
      %22 = vector.broadcast %cst_7 : f32 to vector<8x512xf32>
      %23 = arith.maximumf %21, %22 : vector<8x512xf32>
      %24 = math.sqrt %23 : vector<8x512xf32>
      %cst_8 = arith.constant 0.87758255 : f32
      %25 = vector.broadcast %cst_8 : f32 to vector<8x512xf32>
      %26 = arith.mulf %0, %25 : vector<8x512xf32>
      %cst_9 = arith.constant 0.47942555 : f32
      %27 = vector.broadcast %cst_9 : f32 to vector<8x512xf32>
      %28 = arith.mulf %24, %27 : vector<8x512xf32>
      %29 = arith.subf %26, %28 : vector<8x512xf32>
      %30 = arith.select %18, %29, %0 : vector<8x512xi1>, vector<8x512xf32>
      %31 = vector.broadcast %1 : f32 to vector<8x512xf32>
      %32 = arith.mulf %30, %31 : vector<8x512xf32>
      %c0_10 = arith.constant 0 : index
      %c0_11 = arith.constant 0 : index
      %33 = vector.load %arg6[%c0_10, %c0_11] : memref<8x512xf32, #tpu.memory_space<vmem>>, vector<8x512xf32>
      tpu.vector_store %arg6[%c0_10, %c0_11], %32 {strides = array<i32>} : memref<8x512xf32, #tpu.memory_space<vmem>>, vector<8x512xf32>,
    } else {
    }
    return
  }
  func.func @transform_0(%arg0: i32, %arg1: i32, %arg2: memref<2xi32, #tpu.memory_space<smem>>) -> (i32, i32) {
    %c0_i32 = arith.constant 0 : i32
    %c0_i32_0 = arith.constant 0 : i32
    return %arg0, %c0_i32 : i32, i32
  }
  func.func @transform_1(%arg0: i32, %arg1: i32, %arg2: memref<2xi32, #tpu.memory_space<smem>>) -> i32 {
    %c0_i32 = arith.constant 0 : i32
    %c0_i32_0 = arith.constant 0 : i32
    return %c0_i32 : i32
  }
  func.func @transform_2(%arg0: i32, %arg1: i32, %arg2: memref<2xi32, #tpu.memory_space<smem>>) -> (i32, i32) {
    %c0_i32 = arith.constant 0 : i32
    return %arg0, %arg1 : i32, i32
  }
  func.func @transform_3(%arg0: i32, %arg1: i32, %arg2: memref<2xi32, #tpu.memory_space<smem>>) -> (i32, i32) {
    %c0_i32 = arith.constant 0 : i32
    return %arg0, %arg1 : i32, i32
  }
}

</mosaic_0001>

<llo_original>
// kernel: tpu_custom_call.1
$region0: #{tpu_custom_call.1}
  #allocation0 [shape = 'u32[]', space=smem, size = 0x4, offset = 0x4, fixed_abs, tag = 'smem constant byte address 0x4 - core index']
  #allocation1 [shape = 'u32[72,128]{1,0:T(1,128)}', space=vmem, size = 0x9000, scoped, tag = 'internal scratch']
  #allocation2 [shape = 's32[1]{0}', space=sflag, size = 0x4, scoped, tag = 'scoped memory for tpu_custom_call.1']
  #allocation3 [shape = 'u8[512]{0}', space=smem, size = 0x200, scoped, tag = 'prefetched SMEM operand 0']
  #allocation4 [shape = 'f32[1]{0:T(128)S(6)}', space=smem, size = 0x200, scoped, tag = 'scoped memory for tpu_custom_call.1']
  %s0 = inlined_call_operand.vmem [shape: s32[2], index: 0, kind: input, shape index: {}]
  %s1 = inlined_call_operand.vmem [shape: s32[16,1], index: 1, kind: input, shape index: {}]
  %s2 = inlined_call_operand.<no memory space> [shape: f32[1], index: 2, kind: input, shape index: {}]
  %s3 = inlined_call_operand.hbm [shape: f32[16,512], index: 3, kind: input, shape index: {}, may-alias: {3,4}]
  %s4 = inlined_call_operand.hbm [shape: f32[16,512], index: 4, kind: output, shape index: {}, may-alias: {3,4}]
  %s5 = sld [smem:[#allocation0]]
  $region53: #{tpu_custom_call.1} parent=0
    _
  %s7 = ssub.s32 1, %s5
  %s8 = scalar_select 0, %s7, %s5
  %s10 = sshll.u32 %s0, 4
  %s11 = int_to_ptr.vmem [resolvable:$true] %s10
  %13 = dma.vmem_to_smem %s11, 16, [#allocation3], [#allocation2]
  %14 = sst [smem:[#allocation4]] %s2
  %16 = dma.done [#allocation2], 16
  %17 = sfence
  $region1: #{tpu_custom_call.1} parent=0
    #allocation5 [shape = 'u8[32768]{0}', space=vmem, size = 0x8000, scoped, tag = 'input window, operand 3']
    #allocation6 [shape = 's32[2]{0}', space=sflag, size = 0x8, scoped, tag = 'scoped memory for tpu_custom_call.1']
    #allocation7 [shape = 's32[2]{0}', space=sflag, size = 0x8, scoped, tag = 'scoped memory for tpu_custom_call.1']
    #allocation8 [shape = 'u8[32768]{0}', space=vmem, size = 0x8000, scoped, tag = 'output window, operand 0']
    %18 = vsyncpa [#allocation6], 0
    %s19 = scalar_lea.sflag [#allocation6], 1
    %20 = vsyncpa %s19, 0
    %21 = vsyncpa [#allocation7], 0
    %s22 = scalar_lea.sflag [#allocation7], 1
    %23 = vsyncpa %s22, 0
    loop: start=0, step=1, limit=4
    $region2: #{tpu_custom_call.1} parent=1 // loop_pre_header
      _
    $region3: #{tpu_custom_call.1} parent=1 // loop_header
      %s25 = sphi 0, %s29
      %p26 = scmp.ge.s32.totalorder %s25, 4
      %s32 = sphi 0, %s44
      %s33 = sphi 0, %s40
      %s34 = sphi 0, %s32
      %s35 = sphi 0, %s33
      %s36 = sphi 0, %s34
      %s37 = sphi 0, %s35
      %s47 = sphi 0, %s49
      %s50 = sphi 0, %s47
      %s51 = sphi 0, %s50
      %s67 = sphi 0, %s51
      %s71 = sphi 0, %s71
      %s73 = sphi 0, %s71
      %s74 = sphi 0, %s73
      %s88 = sphi 0, %s74
      %s96 = sphi 0, %s98
      %s99 = sphi 0, %s96
      %s100 = sphi 0, %s99
      %s116 = sphi 0, %s100
      %s124 = sphi 0, %s126
      %s127 = sphi 0, %s124
      %s128 = sphi 0, %s127
      %s144 = sphi 0, %s128
    $region4: #{tpu_custom_call.1} parent=1 // loop_header_branch
      %28 = sbr.rel (%p26) target = $region8
    $region5: #{tpu_custom_call.1} parent=1 // loop_body
      %s30 = ssub.s32 %s25, 1
      %s31 = ssub.s32 %s25, 2
      %s38 = sadd.s32 1, %s33
      %p39 = scmp.ge.s32.totalorder %s38, 1
      %s40 = scalar_select %p39, 0, %s38
      %s41 = sadd.s32 1, %s32
      %s42 = scalar_select %p39, %s41, %s32
      %p43 = scmp.ge.s32.totalorder %s42, 2
      %s44 = scalar_select %p43, 0, %s42
      %s45 = ssub.s32 %s32, %s44
      %p46 = scmp.eq.s32.totalorder %s45, 0
      %s48 = sadd.s32 %s47, 1
      %s49 = scalar_select %p46, %s47, %s48
      %p52 = pneg %p46
      %p53 = scmp.eq.s32.totalorder %s25, 1
      %p54 = por %p52, %p53
      %p55 = scmp.ne.s32.totalorder %s47, %s50
      %p56 = scmp.eq.s32.totalorder %s25, 0
      %p57 = por %p55, %p56
      %p58 = scmp.ne.s32.totalorder %s47, %s50
      %p59 = scmp.eq.s32.totalorder %s30, 1
      %p60 = por %p58, %p59
      %p61 = scmp.ne.s32.totalorder %s50, %s51
      %p62 = scmp.eq.s32.totalorder %s30, 0
      %p63 = por %p61, %p62
      %p64 = scmp.ne.s32.totalorder %s50, %s51
      %p65 = scmp.eq.s32.totalorder %s31, 1
      %p66 = por %p64, %p65
      %p68 = scmp.ne.s32.totalorder %s51, %s67
      %p69 = scmp.eq.s32.totalorder %s31, 0
      %p70 = por %p68, %p69
      %s72 = sadd.s32 %s71, 1
      %p75 = scmp.eq.s32.totalorder %s25, 1
      %p76 = scmp.ne.s32.totalorder %s71, %s73
      %p77 = scmp.eq.s32.totalorder %s25, 0
      %p78 = por %p76, %p77
      %p79 = scmp.ne.s32.totalorder %s71, %s73
      %p80 = scmp.eq.s32.totalorder %s30, 1
      %p81 = por %p79, %p80
      %p82 = scmp.ne.s32.totalorder %s73, %s74
      %p83 = scmp.eq.s32.totalorder %s30, 0
      %p84 = por %p82, %p83
      %p85 = scmp.ne.s32.totalorder %s73, %s74
      %p86 = scmp.eq.s32.totalorder %s31, 1
      %p87 = por %p85, %p86
      %p89 = scmp.ne.s32.totalorder %s74, %s88
      %p90 = scmp.eq.s32.totalorder %s31, 0
      %p91 = por %p89, %p90
      %s92 = ssub.s32 %s32, %s44
      %s93 = ssub.s32 %s33, %s40
      %s94 = sor.u32 %s92, %s93
      %p95 = scmp.eq.s32.totalorder %s94, 0
      %s97 = sadd.s32 %s96, 1
      %s98 = scalar_select %p95, %s96, %s97
      %p101 = pneg %p95
      %p102 = scmp.eq.s32.totalorder %s25, 1
      %p103 = por %p101, %p102
      %p104 = scmp.ne.s32.totalorder %s96, %s99
      %p105 = scmp.eq.s32.totalorder %s25, 0
      %p106 = por %p104, %p105
      %p107 = scmp.ne.s32.totalorder %s96, %s99
      %p108 = scmp.eq.s32.totalorder %s30, 1
      %p109 = por %p107, %p108
      %p110 = scmp.ne.s32.totalorder %s99, %s100
      %p111 = scmp.eq.s32.totalorder %s30, 0
      %p112 = por %p110, %p111
      %p113 = scmp.ne.s32.totalorder %s99, %s100
      %p114 = scmp.eq.s32.totalorder %s31, 1
      %p115 = por %p113, %p114
      %p117 = scmp.ne.s32.totalorder %s100, %s116
      %p118 = scmp.eq.s32.totalorder %s31, 0
      %p119 = por %p117, %p118
      %s120 = ssub.s32 %s32, %s44
      %s121 = ssub.s32 %s33, %s40
      %s122 = sor.u32 %s120, %s121
      %p123 = scmp.eq.s32.totalorder %s122, 0
      %s125 = sadd.s32 %s124, 1
      %s126 = scalar_select %p123, %s124, %s125
      %p129 = pneg %p123
      %p130 = scmp.eq.s32.totalorder %s25, 1
      %p131 = por %p129, %p130
      %p132 = scmp.ne.s32.totalorder %s124, %s127
      %p133 = scmp.eq.s32.totalorder %s25, 0
      %p134 = por %p132, %p133
      %p135 = scmp.ne.s32.totalorder %s124, %s127
      %p136 = scmp.eq.s32.totalorder %s30, 1
      %p137 = por %p135, %p136
      %p138 = scmp.ne.s32.totalorder %s127, %s128
      %p139 = scmp.eq.s32.totalorder %s30, 0
      %p140 = por %p138, %p139
      %p141 = scmp.ne.s32.totalorder %s127, %s128
      %p142 = scmp.eq.s32.totalorder %s31, 1
      %p143 = por %p141, %p142
      %p145 = scmp.ne.s32.totalorder %s128, %s144
      %p146 = scmp.eq.s32.totalorder %s31, 0
      %p147 = por %p145, %p146
      %p148 = scmp.le.s32.totalorder 1, %s25
      %p149 = scmp.lt.s32.totalorder %s25, 3
      %p150 = pnand %p148, %p149
      %p151 = pneg %p150
      // Predicated region
      $region9: #{tpu_custom_call.1} parent=5 // pred_check
        _
      $region10: #{tpu_custom_call.1} parent=5 // pred_check_branch
        %153 = sbr.rel (%p150) target = $region12
      $region11: #{tpu_custom_call.1} parent=5 // pred_region
        %s154 = ssub.s32 %s25, 1
        // Predicated region
        $region13: #{tpu_custom_call.1} parent=11 // pred_check
          %p155 = pneg %p84
        $region14: #{tpu_custom_call.1} parent=11 // pred_check_branch
          %157 = sbr.rel (%p155) target = $region16
        $region15: #{tpu_custom_call.1} parent=11 // pred_region
          _
        $region16: #{tpu_custom_call.1} parent=11 // pred_fallthru
          _
      $region12: #{tpu_custom_call.1} parent=5 // pred_fallthru
        _
      %p158 = scmp.lt.s32.totalorder %s25, 2
      // Predicated region
      $region17: #{tpu_custom_call.1} parent=5 // pred_check
        %p159 = pneg %p158
      $region18: #{tpu_custom_call.1} parent=5 // pred_check_branch
        %161 = sbr.rel (%p159) target = $region20
      $region19: #{tpu_custom_call.1} parent=5 // pred_region
        // Predicated region
        $region21: #{tpu_custom_call.1} parent=19 // pred_check
          %p162 = pneg %p57
        $region22: #{tpu_custom_call.1} parent=19 // pred_check_branch
          %164 = sbr.rel (%p162) target = $region24
        $region23: #{tpu_custom_call.1} parent=19 // pred_region
          %p165 = scmp.lt.s32.totalorder %s32, 1
          %s166 = scalar_select %p165, %s32, 1
          %s167 = smul.addr %s166, 8
          %s168 = scalar_lea.vmem %s1, %s167
        $region24: #{tpu_custom_call.1} parent=19 // pred_fallthru
          _
        // Predicated region
        $region25: #{tpu_custom_call.1} parent=19 // pred_check
          %p169 = pneg %p106
        $region26: #{tpu_custom_call.1} parent=19 // pred_check_branch
          %171 = sbr.rel (%p169) target = $region28
        $region27: #{tpu_custom_call.1} parent=19 // pred_region
          %s172 = sand.u32 %s96, 1
          %s173 = scalar_lea.sflag [#allocation6], %s172
          %s174 = sand.u32 %s96, 1
          %s175 = smul.addr %s174, 32
          %s176 = scalar_lea.vmem [#allocation5], %s175
          %s177 = smul.u32 4, %s33
          %179 = vsyncadd %s173, 0
          %s180 = smul.addr %s32, 4
          %s181 = sadd.s32 %s177, %s180
          %s182 = smul.addr %s181, 8
          %s183 = scalar_lea.hbm %s3, %s182
          %s185 = sshll.u32 %s183, 4
          %s186 = int_to_ptr.hbm [resolvable:$true] %s185
          %s187 = sshll.u32 %s176, 4
          %s188 = int_to_ptr.vmem [resolvable:$true] %s187
          %190 = dma.hbm_to_vmem [thread:$0]  %s186, 512, %s188, %s173
        $region28: #{tpu_custom_call.1} parent=19 // pred_fallthru
          _
      $region20: #{tpu_custom_call.1} parent=5 // pred_fallthru
        _
      %p191 = scmp.le.s32.totalorder 1, %s25
      %p192 = scmp.lt.s32.totalorder %s25, 3
      %p193 = pnand %p191, %p192
      %p194 = pneg %p193
      // Predicated region
      $region29: #{tpu_custom_call.1} parent=5 // pred_check
        _
      $region30: #{tpu_custom_call.1} parent=5 // pred_check_branch
        %196 = sbr.rel (%p193) target = $region32
      $region31: #{tpu_custom_call.1} parent=5 // pred_region
        %s197 = ssub.s32 %s25, 1
        %s198 = sand.u32 %s99, 1
        %s199 = scalar_lea.sflag [#allocation6], %s198
        %s200 = sand.u32 %s99, 1
        %s201 = smul.addr %s200, 32
        %s202 = scalar_lea.vmem [#allocation5], %s201
        // Predicated region
        $region33: #{tpu_custom_call.1} parent=31 // pred_check
          %p203 = pneg %p112
        $region34: #{tpu_custom_call.1} parent=31 // pred_check_branch
          %205 = sbr.rel (%p203) target = $region36
        $region35: #{tpu_custom_call.1} parent=31 // pred_region
          %207 = dma.done %s199, 512
        $region36: #{tpu_custom_call.1} parent=31 // pred_fallthru
          _
        %p208 = scmp.lt.s32.totalorder %s34, 1
        %s209 = scalar_select %p208, %s34, 1
        %s210 = smul.addr %s209, 8
        %s211 = scalar_lea.vmem %s1, %s210
        %p212 = pneg %p63
        %p213 = pneg %p60
        %p214 = pneg %p84
        %p215 = pneg %p81
        %s216 = sand.u32 %s99, 1
        %s217 = scalar_lea.sflag [#allocation6], %s216
        %s218 = sand.u32 %s99, 1
        %s219 = smul.addr %s218, 32
        %s220 = scalar_lea.vmem [#allocation5], %s219
        %p221 = pneg %p112
        %p222 = pneg %p109
        %p223 = pneg %p140
        %p224 = pneg %p137
        %s225 = sand.u32 %s127, 1
        %s226 = scalar_lea.sflag [#allocation7], %s225
        %s227 = sand.u32 %s127, 1
        %s228 = smul.addr %s227, 32
        %s229 = scalar_lea.vmem [#allocation8], %s228
        %p230 = scmp.lt.s32.totalorder %s34, 1
        %s231 = scalar_select %p230, %s34, 1
        %s232 = smul.addr %s231, 8
        %s233 = scalar_lea.vmem %s1, %s232
        %s234 = smul.u32 4, %s35
        %s235 = smul.u32 4, %s35
        %v236 = vld [vmem:[%s202] sm:$0xff]
        %v237 = vld [vmem:[%s202 + $0x8] sm:$0xff]
        %v238 = vld [vmem:[%s202 + $0x10] sm:$0xff]
        %v239 = vld [vmem:[%s202 + $0x18] sm:$0xff]
        %s240 = sld [smem:[#allocation4]]
        %v241 = vstv %s240
        %v242 = vmul.f32 %v236, %v241
        %v243 = vmul.f32 %v237, %v241
        %v244 = vmul.f32 %v238, %v241
        %v245 = vmul.f32 %v239, %v241
        %246 = vst [vmem:[%s229] sm:$0xff] %v242
        %247 = vst [vmem:[%s229 + $0x8] sm:$0xff] %v243
        %248 = vst [vmem:[%s229 + $0x10] sm:$0xff] %v244
        %249 = vst [vmem:[%s229 + $0x18] sm:$0xff] %v245
        %s250 = sadd.s32 %s34, %s35
        %s251 = sld [smem:[#allocation3 + %s250]]
        %p252 = scmp.gt.s32.totalorder %s251, 0
        // Predicated region
        $region37: #{tpu_custom_call.1} parent=31 // pred_check
          %p253 = pneg %p252
        $region38: #{tpu_custom_call.1} parent=31 // pred_check_branch
          %255 = sbr.rel (%p253) target = $region40
        $region39: #{tpu_custom_call.1} parent=31 // pred_region
          %v256 = vld [vmem:[%s233] sm:$0xff]
          %s257 = smul.u32 %s35, 512
          %v258 = vstv %s257
          %v259 = vsub.s32 %v256, %v258
          %v260 = vlaneseq
          %v261 = vand.u32 %v260, 127
          %v262 = vadd.s32 %v261, 128
          %v263 = vadd.s32 %v261, 256
          %v264 = vadd.s32 %v261, 384
          %265 = vset.pattern.permute.xlu0 0
          %266 = vperm.xlu0 %265, %v259
          %v267 = vpop.permute.xlu0 %266
          %vm268 = vcmp.eq.s32.totalorder %v261, %v267
          %vm269 = vcmp.eq.s32.totalorder %v262, %v267
          %vm270 = vcmp.eq.s32.totalorder %v263, %v267
          %vm271 = vcmp.eq.s32.totalorder %v264, %v267
          %v272 = vmul.f32 %v236, %v236
          %v273 = vmul.f32 %v237, %v237
          %v274 = vmul.f32 %v238, %v238
          %v275 = vmul.f32 %v239, %v239
          %v276 = vsub.f32 1.0, %v272
          %v277 = vsub.f32 1.0, %v273
          %v278 = vsub.f32 1.0, %v274
          %v279 = vsub.f32 1.0, %v275
          %v280 = vmax.f32 %v276, 0.0
          %v281 = vmax.f32 %v277, 0.0
          %v282 = vmax.f32 %v278, 0.0
          %v283 = vmax.f32 %v279, 0.0
          %v284 = vrsqrt.pop %v280
          %v285 = vmul.f32 %v284, %v280
          %v286 = vmul.f32 %v285, %v284
          %v287 = vmul.f32 0.5, %v286
          %v288 = vsub.f32 1.5, %v287
          %v289 = vmul.f32 %v284, %v288
          %v290 = vmul.f32 %v280, %v289
          %vm291 = vcmp.eq.f32.partialorder %v280, inf
          %v292 = vsel %vm291, %v280, %v290
          %vm293 = vcmp.eq.f32.partialorder %v280, 0.0
          %v294 = vand.u32 %v280, 2147483648
          %v295 = vsel %vm293, %v294, %v292
          %v296 = vrsqrt.pop %v281
          %v297 = vmul.f32 %v296, %v281
          %v298 = vmul.f32 %v297, %v296
          %v299 = vmul.f32 0.5, %v298
          %v300 = vsub.f32 1.5, %v299
          %v301 = vmul.f32 %v296, %v300
          %v302 = vmul.f32 %v281, %v301
          %vm303 = vcmp.eq.f32.partialorder %v281, inf
          %v304 = vsel %vm303, %v281, %v302
          %vm305 = vcmp.eq.f32.partialorder %v281, 0.0
          %v306 = vand.u32 %v281, 2147483648
          %v307 = vsel %vm305, %v306, %v304
          %v308 = vrsqrt.pop %v282
          %v309 = vmul.f32 %v308, %v282
          %v310 = vmul.f32 %v309, %v308
          %v311 = vmul.f32 0.5, %v310
          %v312 = vsub.f32 1.5, %v311
          %v313 = vmul.f32 %v308, %v312
          %v314 = vmul.f32 %v282, %v313
          %vm315 = vcmp.eq.f32.partialorder %v282, inf
          %v316 = vsel %vm315, %v282, %v314
          %vm317 = vcmp.eq.f32.partialorder %v282, 0.0
          %v318 = vand.u32 %v282, 2147483648
          %v319 = vsel %vm317, %v318, %v316
          %v320 = vrsqrt.pop %v283
          %v321 = vmul.f32 %v320, %v283
          %v322 = vmul.f32 %v321, %v320
          %v323 = vmul.f32 0.5, %v322
          %v324 = vsub.f32 1.5, %v323
          %v325 = vmul.f32 %v320, %v324
          %v326 = vmul.f32 %v283, %v325
          %vm327 = vcmp.eq.f32.partialorder %v283, inf
          %v328 = vsel %vm327, %v283, %v326
          %vm329 = vcmp.eq.f32.partialorder %v283, 0.0
          %v330 = vand.u32 %v283, 2147483648
          %v331 = vsel %vm329, %v330, %v328
          %v332 = vmul.f32 %v236, 0.87758255
          %v333 = vmul.f32 %v237, 0.87758255
          %v334 = vmul.f32 %v238, 0.87758255
          %v335 = vmul.f32 %v239, 0.87758255
          %v336 = vmul.f32 %v295, 0.47942555
          %v337 = vmul.f32 %v307, 0.47942555
          %v338 = vmul.f32 %v319, 0.47942555
          %v339 = vmul.f32 %v331, 0.47942555
          %v340 = vsub.f32 %v332, %v336
          %v341 = vsub.f32 %v333, %v337
          %v342 = vsub.f32 %v334, %v338
          %v343 = vsub.f32 %v335, %v339
          %v344 = vsel %vm268, %v340, %v236
          %v345 = vsel %vm269, %v341, %v237
          %v346 = vsel %vm270, %v342, %v238
          %v347 = vsel %vm271, %v343, %v239
          %v348 = vmul.f32 %v344, %v241
          %v349 = vmul.f32 %v345, %v241
          %v350 = vmul.f32 %v346, %v241
          %v351 = vmul.f32 %v347, %v241
          %352 = vst [vmem:[%s229] sm:$0xff] %v348
          %353 = vst [vmem:[%s229 + $0x8] sm:$0xff] %v349
          %354 = vst [vmem:[%s229 + $0x10] sm:$0xff] %v350
          %355 = vst [vmem:[%s229 + $0x18] sm:$0xff] %v351
        $region40: #{tpu_custom_call.1} parent=31 // pred_fallthru
          _
        %s356 = sand.u32 %s127, 1
        %s357 = scalar_lea.sflag [#allocation7], %s356
        %s358 = sand.u32 %s127, 1
        %s359 = smul.addr %s358, 32
        %s360 = scalar_lea.vmem [#allocation8], %s359
        // Predicated region
        $region41: #{tpu_custom_call.1} parent=31 // pred_check
          %p361 = pneg %p137
        $region42: #{tpu_custom_call.1} parent=31 // pred_check_branch
          %363 = sbr.rel (%p361) target = $region44
        $region43: #{tpu_custom_call.1} parent=31 // pred_region
          %s364 = smul.u32 4, %s35
          %366 = vsyncadd %s357, 0
          %s367 = smul.addr %s34, 4
          %s368 = sadd.s32 %s364, %s367
          %s369 = smul.addr %s368, 8
          %s370 = scalar_lea.hbm %s4, %s369
          %s372 = sshll.u32 %s360, 4
          %s373 = int_to_ptr.vmem [resolvable:$true] %s372
          %s374 = sshll.u32 %s370, 4
          %s375 = int_to_ptr.hbm [resolvable:$true] %s374
          %377 = dma.vmem_to_hbm [thread:$0]  %s373, 512, %s375, %s357
        $region44: #{tpu_custom_call.1} parent=31 // pred_fallthru
          _
      $region32: #{tpu_custom_call.1} parent=5 // pred_fallthru
        _
      %p378 = scmp.le.s32.totalorder 2, %s25
      // Predicated region
      $region45: #{tpu_custom_call.1} parent=5 // pred_check
        %p379 = pneg %p378
      $region46: #{tpu_custom_call.1} parent=5 // pred_check_branch
        %381 = sbr.rel (%p379) target = $region48
      $region47: #{tpu_custom_call.1} parent=5 // pred_region
        %s382 = ssub.s32 %s25, 2
        // Predicated region
        $region49: #{tpu_custom_call.1} parent=47 // pred_check
          %p383 = pneg %p143
        $region50: #{tpu_custom_call.1} parent=47 // pred_check_branch
          %385 = sbr.rel (%p383) target = $region52
        $region51: #{tpu_custom_call.1} parent=47 // pred_region
          %s386 = sand.u32 %s128, 1
          %s387 = scalar_lea.sflag [#allocation7], %s386
          %s388 = sand.u32 %s128, 1
          %s389 = smul.addr %s388, 32
          %s390 = scalar_lea.vmem [#allocation8], %s389
          %392 = dma.done %s387, 512
        $region52: #{tpu_custom_call.1} parent=47 // pred_fallthru
          _
      $region48: #{tpu_custom_call.1} parent=5 // pred_fallthru
        _
    $region6: #{tpu_custom_call.1} parent=1 // loop_footer
      %s29 = sadd.s32 1, %s25
    $region7: #{tpu_custom_call.1} parent=1 // loop_footer_branch
      %24 = sbr.rel target = $region3
    $region8: #{tpu_custom_call.1} parent=1 // loop_exit
      _
    %393 = vsyncpa [#allocation6], 1
    %s394 = scalar_lea.sflag [#allocation6], 1
    %395 = vsyncpa %s394, 1
    %396 = vsyncpa [#allocation7], 1
    %s397 = scalar_lea.sflag [#allocation7], 1
    %398 = vsyncpa %s397, 1

</llo_original>
